<compile_context>
chip_gen: v7x
topology: tpu7x:2x2x1
jax: 0.10.0
libtpu: 0.0.40
codegen_flags: <defaults>
</compile_context>

<pallas_src>
import functools

import jax
import jax.numpy as jnp
import numpy as np
from jax.experimental import pallas as pl
from jax.experimental.pallas import tpu as pltpu


def _upsample_poly_kernel(xm_ref, xh_ref, wee_ref, weo_ref, woe_ref, woo_ref,
                          b_ref, o_ref):
    # xm_ref : (1, TR, W+1, Cin)   main input rows of this tile (right-padded)
    # xh_ref : (1, 1,  W+1, Cin)   one halo row below the tile
    # w*_ref : (taps*Cin, Cout)    folded per-phase weights
    # b_ref  : (1, 2*Cout)         bias duplicated for the two width phases
    # o_ref  : (1, TR, 2, W, 2*Cout)  interleave-ready output layout
    _, TR, Wp, Cin = xm_ref.shape
    W = Wp - 1
    Cout2 = o_ref.shape[-1]

    # Full (TR+1, W+1, Cin) tile including the halo row.
    x = jnp.concatenate([xm_ref[0], xh_ref[0]], axis=0)

    # The four shifted views needed by the polyphase taps, as matmul operands.
    x00 = x[:TR, :W, :].reshape(TR * W, Cin)   # (r,   c)
    x01 = x[:TR, 1:, :].reshape(TR * W, Cin)   # (r,   c+1)
    x10 = x[1:, :W, :].reshape(TR * W, Cin)    # (r+1, c)
    x11 = x[1:, 1:, :].reshape(TR * W, Cin)    # (r+1, c+1)

    def dotf(a, b):
        return jnp.dot(a, b, preferred_element_type=jnp.float32)

    # One matmul per output parity phase (taps folded into K).
    ee = dotf(x00, wee_ref[...])                                    # K =   Cin
    eo = dotf(jnp.concatenate([x00, x01], axis=-1), weo_ref[...])   # K = 2*Cin
    oe = dotf(jnp.concatenate([x00, x10], axis=-1), woe_ref[...])   # K = 2*Cin
    oo = dotf(jnp.concatenate([x00, x01, x10, x11], axis=-1),
              woo_ref[...])                                         # K = 4*Cin

    bias = b_ref[...]                                   # (1, 2*Cout)
    even = jnp.concatenate([ee, eo], axis=-1) + bias    # output rows 2r
    odd = jnp.concatenate([oe, oo], axis=-1) + bias     # output rows 2r+1

    o_ref[0, :, 0, :, :] = even.reshape(TR, W, Cout2).astype(o_ref.dtype)
    o_ref[0, :, 1, :, :] = odd.reshape(TR, W, Cout2).astype(o_ref.dtype)


def _pick_tile_rows(H, W, Cin, Cout, itemsize=4, budget_bytes=8 * 1024 * 1024):
    """Largest row-tile that keeps the double-buffered working set bounded."""
    per_row = ((W + 1) * Cin          # input tile row
               + 4 * W * Cout         # interleaved output rows (2 x 2W x Cout)
               + 8 * W * Cin          # shifted views / matmul operands
               ) * itemsize
    tr = max(1, int(budget_bytes // (2 * per_row)))
    tr = min(tr, H)
    while H % tr:
        tr -= 1
    return tr


def upsample_deconv(x_nchw, w_t, bias, *, tile_rows=None):
    """Forward of UpSample: ConvTranspose2d(k=3, s=2, p=1, output_padding=1).

    x_nchw : (N, Cin, H, W) float32
    w_t    : (Cin, Cout, 3, 3)  PyTorch ConvTranspose2d weight layout
    bias   : (Cout,)
    returns: (N, Cout, 2H, 2W)
    """
    N, Cin, H, W = x_nchw.shape
    Cout = w_t.shape[1]

    # NHWC + one zero row/col at the high edge (covers the ih=H / iw=W taps of
    # the odd output phases; output_padding=1 semantics).
    x_nhwc = jnp.transpose(x_nchw, (0, 2, 3, 1))
    x_pad = jnp.pad(x_nhwc, ((0, 0), (0, 1), (0, 1), (0, 0)))  # (N, H+1, W+1, Cin)
    Wp = W + 1

    # Folded per-phase weights.  With oh = 2*ih - 1 + kh (and same in w):
    #   ee[r,c] = x[r,c]   w[1,1]
    #   eo[r,c] = x[r,c]   w[1,2] + x[r,c+1] w[1,0]
    #   oe[r,c] = x[r,c]   w[2,1] + x[r+1,c] w[0,1]
    #   oo[r,c] = x[r,c]   w[2,2] + x[r,c+1] w[2,0]
    #           + x[r+1,c] w[0,2] + x[r+1,c+1] w[0,0]
    def wk(kh, kw):
        return w_t[:, :, kh, kw]                        # (Cin, Cout)

    w_ee = wk(1, 1)
    w_eo = jnp.concatenate([wk(1, 2), wk(1, 0)], axis=0)
    w_oe = jnp.concatenate([wk(2, 1), wk(0, 1)], axis=0)
    w_oo = jnp.concatenate([wk(2, 2), wk(2, 0), wk(0, 2), wk(0, 0)], axis=0)
    b2 = jnp.concatenate([bias, bias]).reshape(1, 2 * Cout)

    TR = _pick_tile_rows(H, W, Cin, Cout) if tile_rows is None else tile_rows
    if H % TR != 0:
        raise ValueError(f"tile_rows={TR} must divide H={H}")
    n_rt = H // TR

    out5 = pl.pallas_call(
        _upsample_poly_kernel,
        out_shape=jax.ShapeDtypeStruct((N, H, 2, W, 2 * Cout), x_nchw.dtype),
        grid_spec=pltpu.PrefetchScalarGridSpec(
            num_scalar_prefetch=0,
            grid=(N, n_rt),
            in_specs=[
                # Main TR input rows of this tile.
                pl.BlockSpec((1, TR, Wp, Cin), lambda n, r: (n, r, 0, 0)),
                # One halo row just below the tile (row (r+1)*TR; row H is the
                # zero padding row).
                pl.BlockSpec((1, 1, Wp, Cin),
                             lambda n, r: (n, (r + 1) * TR, 0, 0)),
                pl.BlockSpec((Cin, Cout), lambda n, r: (0, 0)),
                pl.BlockSpec((2 * Cin, Cout), lambda n, r: (0, 0)),
                pl.BlockSpec((2 * Cin, Cout), lambda n, r: (0, 0)),
                pl.BlockSpec((4 * Cin, Cout), lambda n, r: (0, 0)),
                pl.BlockSpec((1, 2 * Cout), lambda n, r: (0, 0)),
            ],
            out_specs=pl.BlockSpec((1, TR, 2, W, 2 * Cout),
                                   lambda n, r: (n, r, 0, 0, 0)),
        ),
        compiler_params=pltpu.CompilerParams(
            dimension_semantics=("parallel", "parallel")),
    )(x_pad, x_pad, w_ee, w_eo, w_oe, w_oo, b2)

    # (N, H, 2, W, 2*Cout) is exactly the contiguous interleaved layout of
    # (N, 2H, 2W, Cout): this reshape is metadata-only.
    y_nhwc = out5.reshape(N, 2 * H, 2 * W, Cout)
    return jnp.transpose(y_nhwc, (0, 3, 1, 2))


if __name__ == "__main__":
    key = jax.random.PRNGKey(0)
    kx, kw, kb = jax.random.split(key, 3)

    N, Cin, Cout, H, W = 2, 4, 4, 16, 16
    x = jax.random.normal(kx, (N, Cin, H, W), jnp.float32)

    # Deterministic parameter init (uniform +-1/sqrt(fan_in), like PyTorch).
    bound = 1.0 / np.sqrt(Cin * 3 * 3)
    w_t = jax.random.uniform(kw, (Cin, Cout, 3, 3), jnp.float32, -bound, bound)
    b = jax.random.uniform(kb, (Cout,), jnp.float32, -bound, bound)

    fn = jax.jit(upsample_deconv, static_argnames=("tile_rows",))

    # Multi-row-tile path (exercises the halo BlockSpec) and the auto-tiled path.
    y_tiled = jax.block_until_ready(fn(x, w_t, b, tile_rows=4))
    y_auto = jax.block_until_ready(fn(x, w_t, b))

    # Pure-JAX reference: lhs-dilated conv with flipped/swapped kernel
    # (standard equivalence to ConvTranspose2d(k=3, s=2, p=1, out_pad=1)).
    w_oihw = jnp.transpose(w_t, (1, 0, 2, 3))[:, :, ::-1, ::-1]
    ref = jax.lax.conv_general_dilated(
        x, w_oihw, window_strides=(1, 1), padding=[(1, 2), (1, 2)],
        lhs_dilation=(2, 2),
        dimension_numbers=("NCHW", "OIHW", "NCHW")) + b[None, :, None, None]

    assert y_tiled.shape == (N, Cout, 2 * H, 2 * W)
    np.testing.assert_allclose(np.asarray(y_tiled), np.asarray(ref),
                               rtol=1e-5, atol=1e-5)
    np.testing.assert_allclose(np.asarray(y_auto), np.asarray(ref),
                               rtol=1e-5, atol=1e-5)
    print("KERNEL_OK")
</pallas_src>

<mosaic_0001>
module attributes {stable_mosaic.version = 11 : i64} {
  func.func @_upsample_poly_kernel(%arg0: i32, %arg1: i32, %arg2: memref<1x4x17x4xf32, #tpu.memory_space<vmem>>, %arg3: memref<1x1x17x4xf32, #tpu.memory_space<vmem>>, %arg4: memref<4x4xf32, #tpu.memory_space<vmem>>, %arg5: memref<8x4xf32, #tpu.memory_space<vmem>>, %arg6: memref<8x4xf32, #tpu.memory_space<vmem>>, %arg7: memref<16x4xf32, #tpu.memory_space<vmem>>, %arg8: memref<1x8xf32, #tpu.memory_space<vmem>>, %arg9: memref<1x4x2x16x8xf32, #tpu.memory_space<vmem>>) attributes {dimension_semantics = [#tpu.dimension_semantics<parallel>, #tpu.dimension_semantics<parallel>], iteration_bounds = array<i64: 2, 4>, scalar_prefetch = 0 : i64, scratch_operands = 0 : i64, tpu.core_type = #tpu.core_type<tc>, window_params = [{transform_indices = @transform_0, window_bounds = array<i64: 1, 4, 17, 4>}, {transform_indices = @transform_1, window_bounds = array<i64: 1, 1, 17, 4>}, {pipeline_mode = #tpu.pipeline_mode<synchronous>, transform_indices = @transform_2, window_bounds = array<i64: 4, 4>}, {pipeline_mode = #tpu.pipeline_mode<synchronous>, transform_indices = @transform_3, window_bounds = array<i64: 8, 4>}, {pipeline_mode = #tpu.pipeline_mode<synchronous>, transform_indices = @transform_4, window_bounds = array<i64: 8, 4>}, {pipeline_mode = #tpu.pipeline_mode<synchronous>, transform_indices = @transform_5, window_bounds = array<i64: 16, 4>}, {pipeline_mode = #tpu.pipeline_mode<synchronous>, transform_indices = @transform_6, window_bounds = array<i64: 1, 8>}, {transform_indices = @transform_7, window_bounds = array<i64: 1, 4, 2, 16, 8>}]} {
    %c0 = arith.constant 0 : index
    %c0_0 = arith.constant 0 : index
    %c0_1 = arith.constant 0 : index
    %c0_2 = arith.constant 0 : index
    %0 = vector.load %arg2[%c0, %c0_0, %c0_1, %c0_2] : memref<1x4x17x4xf32, #tpu.memory_space<vmem>>, vector<1x4x17x4xf32>
    %1 = vector.shape_cast %0 : vector<1x4x17x4xf32> to vector<4x17x4xf32>
    %c0_3 = arith.constant 0 : index
    %c0_4 = arith.constant 0 : index
    %c0_5 = arith.constant 0 : index
    %c0_6 = arith.constant 0 : index
    %2 = vector.load %arg3[%c0_3, %c0_4, %c0_5, %c0_6] : memref<1x1x17x4xf32, #tpu.memory_space<vmem>>, vector<1x1x17x4xf32>
    %3 = vector.shape_cast %2 : vector<1x1x17x4xf32> to vector<1x17x4xf32>
    %4 = tpu.concatenate %1, %3 in 0 : vector<4x17x4xf32>, vector<1x17x4xf32> -> vector<5x17x4xf32>
    %5 = vector.extract_strided_slice %4 {offsets = [0, 0, 0], sizes = [4, 16, 4], strides = [1, 1, 1]} : vector<5x17x4xf32> to vector<4x16x4xf32>
    %6 = vector.shape_cast %5 : vector<4x16x4xf32> to vector<64x4xf32>
    %7 = vector.extract_strided_slice %4 {offsets = [0, 1, 0], sizes = [4, 16, 4], strides = [1, 1, 1]} : vector<5x17x4xf32> to vector<4x16x4xf32>
    %8 = vector.shape_cast %7 : vector<4x16x4xf32> to vector<64x4xf32>
    %9 = vector.extract_strided_slice %4 {offsets = [1, 0, 0], sizes = [4, 16, 4], strides = [1, 1, 1]} : vector<5x17x4xf32> to vector<4x16x4xf32>
    %10 = vector.shape_cast %9 : vector<4x16x4xf32> to vector<64x4xf32>
    %11 = vector.extract_strided_slice %4 {offsets = [1, 1, 0], sizes = [4, 16, 4], strides = [1, 1, 1]} : vector<5x17x4xf32> to vector<4x16x4xf32>
    %12 = vector.shape_cast %11 : vector<4x16x4xf32> to vector<64x4xf32>
    %c0_7 = arith.constant 0 : index
    %c0_8 = arith.constant 0 : index
    %13 = vector.load %arg4[%c0_7, %c0_8] : memref<4x4xf32, #tpu.memory_space<vmem>>, vector<4x4xf32>
    %cst = arith.constant dense<0.000000e+00> : vector<64x4xf32>
    %14 = tpu.matmul %6, %13, %cst {dimension_numbers = #tpu.dot_dimension_numbers<[1], [0], [0], [1], [0, 0, 1, 1], [], []>} : vector<64x4xf32>, vector<4x4xf32>, vector<64x4xf32> -> vector<64x4xf32>
    %15 = tpu.concatenate %6, %8 in 1 : vector<64x4xf32>, vector<64x4xf32> -> vector<64x8xf32>
    %c0_9 = arith.constant 0 : index
    %c0_10 = arith.constant 0 : index
    %16 = vector.load %arg5[%c0_9, %c0_10] : memref<8x4xf32, #tpu.memory_space<vmem>>, vector<8x4xf32>
    %cst_11 = arith.constant dense<0.000000e+00> : vector<64x4xf32>
    %17 = tpu.matmul %15, %16, %cst_11 {dimension_numbers = #tpu.dot_dimension_numbers<[1], [0], [0], [1], [0, 0, 1, 1], [], []>} : vector<64x8xf32>, vector<8x4xf32>, vector<64x4xf32> -> vector<64x4xf32>
    %18 = tpu.concatenate %6, %10 in 1 : vector<64x4xf32>, vector<64x4xf32> -> vector<64x8xf32>
    %c0_12 = arith.constant 0 : index
    %c0_13 = arith.constant 0 : index
    %19 = vector.load %arg6[%c0_12, %c0_13] : memref<8x4xf32, #tpu.memory_space<vmem>>, vector<8x4xf32>
    %cst_14 = arith.constant dense<0.000000e+00> : vector<64x4xf32>
    %20 = tpu.matmul %18, %19, %cst_14 {dimension_numbers = #tpu.dot_dimension_numbers<[1], [0], [0], [1], [0, 0, 1, 1], [], []>} : vector<64x8xf32>, vector<8x4xf32>, vector<64x4xf32> -> vector<64x4xf32>
    %21 = tpu.concatenate %6, %8, %10, %12 in 1 : vector<64x4xf32>, vector<64x4xf32>, vector<64x4xf32>, vector<64x4xf32> -> vector<64x16xf32>
    %c0_15 = arith.constant 0 : index
    %c0_16 = arith.constant 0 : index
    %22 = vector.load %arg7[%c0_15, %c0_16] : memref<16x4xf32, #tpu.memory_space<vmem>>, vector<16x4xf32>
    %cst_17 = arith.constant dense<0.000000e+00> : vector<64x4xf32>
    %23 = tpu.matmul %21, %22, %cst_17 {dimension_numbers = #tpu.dot_dimension_numbers<[1], [0], [0], [1], [0, 0, 1, 1], [], []>} : vector<64x16xf32>, vector<16x4xf32>, vector<64x4xf32> -> vector<64x4xf32>
    %c0_18 = arith.constant 0 : index
    %c0_19 = arith.constant 0 : index
    %24 = vector.load %arg8[%c0_18, %c0_19] : memref<1x8xf32, #tpu.memory_space<vmem>>, vector<1x8xf32>
    %25 = tpu.concatenate %14, %17 in 1 : vector<64x4xf32>, vector<64x4xf32> -> vector<64x8xf32>
    %26 = vector.broadcast %24 : vector<1x8xf32> to vector<64x8xf32>
    %27 = arith.addf %25, %26 : vector<64x8xf32>
    %28 = tpu.concatenate %20, %23 in 1 : vector<64x4xf32>, vector<64x4xf32> -> vector<64x8xf32>
    %29 = vector.broadcast %24 : vector<1x8xf32> to vector<64x8xf32>
    %30 = arith.addf %28, %29 : vector<64x8xf32>
    %31 = vector.shape_cast %27 : vector<64x8xf32> to vector<4x16x8xf32>
    %c0_20 = arith.constant 0 : index
    %c0_21 = arith.constant 0 : index
    %c0_22 = arith.constant 0 : index
    %c0_23 = arith.constant 0 : index
    %c0_24 = arith.constant 0 : index
    %32 = vector.load %arg9[%c0_20, %c0_21, %c0_22, %c0_23, %c0_24] : memref<1x4x2x16x8xf32, #tpu.memory_space<vmem>>, vector<1x4x1x16x8xf32>
    %33 = vector.shape_cast %32 : vector<1x4x1x16x8xf32> to vector<4x16x8xf32>
    %34 = vector.shape_cast %31 : vector<4x16x8xf32> to vector<1x4x1x16x8xf32>
    tpu.vector_store %arg9[%c0_20, %c0_21, %c0_22, %c0_23, %c0_24], %34 {strides = array<i32>} : memref<1x4x2x16x8xf32, #tpu.memory_space<vmem>>, vector<1x4x1x16x8xf32>,
    %35 = vector.shape_cast %30 : vector<64x8xf32> to vector<4x16x8xf32>
    %c0_25 = arith.constant 0 : index
    %c0_26 = arith.constant 0 : index
    %c1 = arith.constant 1 : index
    %c0_27 = arith.constant 0 : index
    %c0_28 = arith.constant 0 : index
    %36 = vector.load %arg9[%c0_25, %c0_26, %c1, %c0_27, %c0_28] : memref<1x4x2x16x8xf32, #tpu.memory_space<vmem>>, vector<1x4x1x16x8xf32>
    %37 = vector.shape_cast %36 : vector<1x4x1x16x8xf32> to vector<4x16x8xf32>
    %38 = vector.shape_cast %35 : vector<4x16x8xf32> to vector<1x4x1x16x8xf32>
    tpu.vector_store %arg9[%c0_25, %c0_26, %c1, %c0_27, %c0_28], %38 {strides = array<i32>} : memref<1x4x2x16x8xf32, #tpu.memory_space<vmem>>, vector<1x4x1x16x8xf32>,
    return
  }
  func.func @transform_0(%arg0: i32, %arg1: i32) -> (i32, i32, i32, i32) {
    %c0_i32 = arith.constant 0 : i32
    %c0_i32_0 = arith.constant 0 : i32
    %c0_i32_1 = arith.constant 0 : i32
    return %arg0, %arg1, %c0_i32, %c0_i32_0 : i32, i32, i32, i32
  }
  func.func @transform_1(%arg0: i32, %arg1: i32) -> (i32, i32, i32, i32) {
    %c1_i32 = arith.constant 1 : i32
    %0 = arith.addi %arg1, %c1_i32 : i32
    %c4_i32 = arith.constant 4 : i32
    %1 = arith.muli %0, %c4_i32 : i32
    %c0_i32 = arith.constant 0 : i32
    %c0_i32_0 = arith.constant 0 : i32
    %c0_i32_1 = arith.constant 0 : i32
    return %arg0, %1, %c0_i32, %c0_i32_0 : i32, i32, i32, i32
  }
  func.func @transform_2(%arg0: i32, %arg1: i32) -> (i32, i32) {
    %c0_i32 = arith.constant 0 : i32
    %c0_i32_0 = arith.constant 0 : i32
    %c0_i32_1 = arith.constant 0 : i32
    return %c0_i32, %c0_i32_0 : i32, i32
  }
  func.func @transform_3(%arg0: i32, %arg1: i32) -> (i32, i32) {
    %c0_i32 = arith.constant 0 : i32
    %c0_i32_0 = arith.constant 0 : i32
    %c0_i32_1 = arith.constant 0 : i32
    return %c0_i32, %c0_i32_0 : i32, i32
  }
  func.func @transform_4(%arg0: i32, %arg1: i32) -> (i32, i32) {
    %c0_i32 = arith.constant 0 : i32
    %c0_i32_0 = arith.constant 0 : i32
    %c0_i32_1 = arith.constant 0 : i32
    return %c0_i32, %c0_i32_0 : i32, i32
  }
  func.func @transform_5(%arg0: i32, %arg1: i32) -> (i32, i32) {
    %c0_i32 = arith.constant 0 : i32
    %c0_i32_0 = arith.constant 0 : i32
    %c0_i32_1 = arith.constant 0 : i32
    return %c0_i32, %c0_i32_0 : i32, i32
  }
  func.func @transform_6(%arg0: i32, %arg1: i32) -> (i32, i32) {
    %c0_i32 = arith.constant 0 : i32
    %c0_i32_0 = arith.constant 0 : i32
    %c0_i32_1 = arith.constant 0 : i32
    return %c0_i32, %c0_i32_0 : i32, i32
  }
  func.func @transform_7(%arg0: i32, %arg1: i32) -> (i32, i32, i32, i32, i32) {
    %c0_i32 = arith.constant 0 : i32
    %c0_i32_0 = arith.constant 0 : i32
    %c0_i32_1 = arith.constant 0 : i32
    %c0_i32_2 = arith.constant 0 : i32
    return %arg0, %arg1, %c0_i32, %c0_i32_0, %c0_i32_1 : i32, i32, i32, i32, i32
  }
}

</mosaic_0001>

<llo_original>
// kernel: upsample_deconv.1
$region0: #{upsample_deconv.1}
  #allocation0 [shape = 'u32[]', space=smem, size = 0x4, offset = 0x4, fixed_abs, tag = 'smem constant byte address 0x4 - core index']
  #allocation1 [shape = 'u32[144,128]{1,0:T(1,128)}', space=vmem, size = 0x12000, scoped, tag = 'internal scratch']
  %s0 = inlined_call_operand.vmem [shape: f32[2,17,17,4], index: 0, kind: input, shape index: {}, may-alias: {0,1}]
  %s1 = inlined_call_operand.vmem [shape: f32[2,17,17,4], index: 1, kind: input, shape index: {}, may-alias: {0,1}]
  %s2 = inlined_call_operand.vmem [shape: f32[4,4], index: 2, kind: input, shape index: {}]
  %s3 = inlined_call_operand.vmem [shape: f32[8,4], index: 3, kind: input, shape index: {}]
  %s4 = inlined_call_operand.vmem [shape: f32[8,4], index: 4, kind: input, shape index: {}]
  %s5 = inlined_call_operand.vmem [shape: f32[16,4], index: 5, kind: input, shape index: {}]
  %s6 = inlined_call_operand.vmem [shape: f32[1,8], index: 6, kind: input, shape index: {}]
  %s7 = inlined_call_operand.vmem [shape: f32[2,16,2,16,8], index: 7, kind: output, shape index: {}]
  %s8 = sld [smem:[#allocation0]]
  $region61: #{upsample_deconv.1} parent=0
    _
  %s10 = ssub.s32 1, %s8
  %s11 = scalar_select 0, %s10, %s8
  loop: start=0, step=1, limit=10
  $region2: #{upsample_deconv.1} parent=0 // loop_pre_header
    _
  $region3: #{upsample_deconv.1} parent=0 // loop_header
    %s13 = sphi 0, %s17
    %p14 = scmp.ge.s32.totalorder %s13, 10
    %s20 = sphi 0, %s32
    %s21 = sphi 0, %s28
    %s22 = sphi 0, %s20
    %s23 = sphi 0, %s21
    %s24 = sphi 0, %s22
    %s25 = sphi 0, %s23
    %s37 = sphi 0, %s39
    %s40 = sphi 0, %s37
    %s41 = sphi 0, %s40
    %s57 = sphi 0, %s41
    %s69 = sphi 0, %s71
    %s72 = sphi 0, %s69
    %s73 = sphi 0, %s72
    %s89 = sphi 0, %s73
    %s93 = sphi 0, %s93
    %s95 = sphi 0, %s93
    %s96 = sphi 0, %s95
    %s110 = sphi 0, %s96
    %s114 = sphi 0, %s114
    %s116 = sphi 0, %s114
    %s117 = sphi 0, %s116
    %s131 = sphi 0, %s117
    %s135 = sphi 0, %s135
    %s137 = sphi 0, %s135
    %s138 = sphi 0, %s137
    %s152 = sphi 0, %s138
    %s156 = sphi 0, %s156
    %s158 = sphi 0, %s156
    %s159 = sphi 0, %s158
    %s173 = sphi 0, %s159
    %s177 = sphi 0, %s177
    %s179 = sphi 0, %s177
    %s180 = sphi 0, %s179
    %s194 = sphi 0, %s180
    %s202 = sphi 0, %s204
    %s205 = sphi 0, %s202
    %s206 = sphi 0, %s205
    %s222 = sphi 0, %s206
  $region4: #{upsample_deconv.1} parent=0 // loop_header_branch
    %16 = sbr.rel (%p14) target = $region8
  $region5: #{upsample_deconv.1} parent=0 // loop_body
    %s18 = ssub.s32 %s13, 1
    %s19 = ssub.s32 %s13, 2
    %s26 = sadd.s32 1, %s21
    %p27 = scmp.ge.s32.totalorder %s26, 4
    %s28 = scalar_select %p27, 0, %s26
    %s29 = sadd.s32 1, %s20
    %s30 = scalar_select %p27, %s29, %s20
    %p31 = scmp.ge.s32.totalorder %s30, 2
    %s32 = scalar_select %p31, 0, %s30
    %s33 = ssub.s32 %s20, %s32
    %s34 = ssub.s32 %s21, %s28
    %s35 = sor.u32 %s33, %s34
    %p36 = scmp.eq.s32.totalorder %s35, 0
    %s38 = sadd.s32 %s37, 1
    %s39 = scalar_select %p36, %s37, %s38
    %p42 = pneg %p36
    %p43 = scmp.eq.s32.totalorder %s13, 7
    %p44 = por %p42, %p43
    %p45 = scmp.ne.s32.totalorder %s37, %s40
    %p46 = scmp.eq.s32.totalorder %s13, 0
    %p47 = por %p45, %p46
    %p48 = scmp.ne.s32.totalorder %s37, %s40
    %p49 = scmp.eq.s32.totalorder %s18, 7
    %p50 = por %p48, %p49
    %p51 = scmp.ne.s32.totalorder %s40, %s41
    %p52 = scmp.eq.s32.totalorder %s18, 0
    %p53 = por %p51, %p52
    %p54 = scmp.ne.s32.totalorder %s40, %s41
    %p55 = scmp.eq.s32.totalorder %s19, 7
    %p56 = por %p54, %p55
    %p58 = scmp.ne.s32.totalorder %s41, %s57
    %p59 = scmp.eq.s32.totalorder %s19, 0
    %p60 = por %p58, %p59
    %s61 = sadd.s32 %s21, 1
    %s62 = smul.u32 %s61, 4
    %s63 = sadd.s32 %s28, 1
    %s64 = smul.u32 %s63, 4
    %s65 = ssub.s32 %s20, %s32
    %s66 = ssub.s32 %s62, %s64
    %s67 = sor.u32 %s65, %s66
    %p68 = scmp.eq.s32.totalorder %s67, 0
    %s70 = sadd.s32 %s69, 1
    %s71 = scalar_select %p68, %s69, %s70
    %p74 = pneg %p68
    %p75 = scmp.eq.s32.totalorder %s13, 7
    %p76 = por %p74, %p75
    %p77 = scmp.ne.s32.totalorder %s69, %s72
    %p78 = scmp.eq.s32.totalorder %s13, 0
    %p79 = por %p77, %p78
    %p80 = scmp.ne.s32.totalorder %s69, %s72
    %p81 = scmp.eq.s32.totalorder %s18, 7
    %p82 = por %p80, %p81
    %p83 = scmp.ne.s32.totalorder %s72, %s73
    %p84 = scmp.eq.s32.totalorder %s18, 0
    %p85 = por %p83, %p84
    %p86 = scmp.ne.s32.totalorder %s72, %s73
    %p87 = scmp.eq.s32.totalorder %s19, 7
    %p88 = por %p86, %p87
    %p90 = scmp.ne.s32.totalorder %s73, %s89
    %p91 = scmp.eq.s32.totalorder %s19, 0
    %p92 = por %p90, %p91
    %s94 = sadd.s32 %s93, 1
    %p97 = scmp.eq.s32.totalorder %s13, 7
    %p98 = scmp.ne.s32.totalorder %s93, %s95
    %p99 = scmp.eq.s32.totalorder %s13, 0
    %p100 = por %p98, %p99
    %p101 = scmp.ne.s32.totalorder %s93, %s95
    %p102 = scmp.eq.s32.totalorder %s18, 7
    %p103 = por %p101, %p102
    %p104 = scmp.ne.s32.totalorder %s95, %s96
    %p105 = scmp.eq.s32.totalorder %s18, 0
    %p106 = por %p104, %p105
    %p107 = scmp.ne.s32.totalorder %s95, %s96
    %p108 = scmp.eq.s32.totalorder %s19, 7
    %p109 = por %p107, %p108
    %p111 = scmp.ne.s32.totalorder %s96, %s110
    %p112 = scmp.eq.s32.totalorder %s19, 0
    %p113 = por %p111, %p112
    %s115 = sadd.s32 %s114, 1
    %p118 = scmp.eq.s32.totalorder %s13, 7
    %p119 = scmp.ne.s32.totalorder %s114, %s116
    %p120 = scmp.eq.s32.totalorder %s13, 0
    %p121 = por %p119, %p120
    %p122 = scmp.ne.s32.totalorder %s114, %s116
    %p123 = scmp.eq.s32.totalorder %s18, 7
    %p124 = por %p122, %p123
    %p125 = scmp.ne.s32.totalorder %s116, %s117
    %p126 = scmp.eq.s32.totalorder %s18, 0
    %p127 = por %p125, %p126
    %p128 = scmp.ne.s32.totalorder %s116, %s117
    %p129 = scmp.eq.s32.totalorder %s19, 7
    %p130 = por %p128, %p129
    %p132 = scmp.ne.s32.totalorder %s117, %s131
    %p133 = scmp.eq.s32.totalorder %s19, 0
    %p134 = por %p132, %p133
    %s136 = sadd.s32 %s135, 1
    %p139 = scmp.eq.s32.totalorder %s13, 7
    %p140 = scmp.ne.s32.totalorder %s135, %s137
    %p141 = scmp.eq.s32.totalorder %s13, 0
    %p142 = por %p140, %p141
    %p143 = scmp.ne.s32.totalorder %s135, %s137
    %p144 = scmp.eq.s32.totalorder %s18, 7
    %p145 = por %p143, %p144
    %p146 = scmp.ne.s32.totalorder %s137, %s138
    %p147 = scmp.eq.s32.totalorder %s18, 0
    %p148 = por %p146, %p147
    %p149 = scmp.ne.s32.totalorder %s137, %s138
    %p150 = scmp.eq.s32.totalorder %s19, 7
    %p151 = por %p149, %p150
    %p153 = scmp.ne.s32.totalorder %s138, %s152
    %p154 = scmp.eq.s32.totalorder %s19, 0
    %p155 = por %p153, %p154
    %s157 = sadd.s32 %s156, 1
    %p160 = scmp.eq.s32.totalorder %s13, 7
    %p161 = scmp.ne.s32.totalorder %s156, %s158
    %p162 = scmp.eq.s32.totalorder %s13, 0
    %p163 = por %p161, %p162
    %p164 = scmp.ne.s32.totalorder %s156, %s158
    %p165 = scmp.eq.s32.totalorder %s18, 7
    %p166 = por %p164, %p165
    %p167 = scmp.ne.s32.totalorder %s158, %s159
    %p168 = scmp.eq.s32.totalorder %s18, 0
    %p169 = por %p167, %p168
    %p170 = scmp.ne.s32.totalorder %s158, %s159
    %p171 = scmp.eq.s32.totalorder %s19, 7
    %p172 = por %p170, %p171
    %p174 = scmp.ne.s32.totalorder %s159, %s173
    %p175 = scmp.eq.s32.totalorder %s19, 0
    %p176 = por %p174, %p175
    %s178 = sadd.s32 %s177, 1
    %p181 = scmp.eq.s32.totalorder %s13, 7
    %p182 = scmp.ne.s32.totalorder %s177, %s179
    %p183 = scmp.eq.s32.totalorder %s13, 0
    %p184 = por %p182, %p183
    %p185 = scmp.ne.s32.totalorder %s177, %s179
    %p186 = scmp.eq.s32.totalorder %s18, 7
    %p187 = por %p185, %p186
    %p188 = scmp.ne.s32.totalorder %s179, %s180
    %p189 = scmp.eq.s32.totalorder %s18, 0
    %p190 = por %p188, %p189
    %p191 = scmp.ne.s32.totalorder %s179, %s180
    %p192 = scmp.eq.s32.totalorder %s19, 7
    %p193 = por %p191, %p192
    %p195 = scmp.ne.s32.totalorder %s180, %s194
    %p196 = scmp.eq.s32.totalorder %s19, 0
    %p197 = por %p195, %p196
    %s198 = ssub.s32 %s20, %s32
    %s199 = ssub.s32 %s21, %s28
    %s200 = sor.u32 %s198, %s199
    %p201 = scmp.eq.s32.totalorder %s200, 0
    %s203 = sadd.s32 %s202, 1
    %s204 = scalar_select %p201, %s202, %s203
    %p207 = pneg %p201
    %p208 = scmp.eq.s32.totalorder %s13, 7
    %p209 = por %p207, %p208
    %p210 = scmp.ne.s32.totalorder %s202, %s205
    %p211 = scmp.eq.s32.totalorder %s13, 0
    %p212 = por %p210, %p211
    %p213 = scmp.ne.s32.totalorder %s202, %s205
    %p214 = scmp.eq.s32.totalorder %s18, 7
    %p215 = por %p213, %p214
    %p216 = scmp.ne.s32.totalorder %s205, %s206
    %p217 = scmp.eq.s32.totalorder %s18, 0
    %p218 = por %p216, %p217
    %p219 = scmp.ne.s32.totalorder %s205, %s206
    %p220 = scmp.eq.s32.totalorder %s19, 7
    %p221 = por %p219, %p220
    %p223 = scmp.ne.s32.totalorder %s206, %s222
    %p224 = scmp.eq.s32.totalorder %s19, 0
    %p225 = por %p223, %p224
    %p226 = scmp.le.s32.totalorder 1, %s13
    %p227 = scmp.lt.s32.totalorder %s13, 9
    %p228 = pnand %p226, %p227
    %p229 = pneg %p228
    // Predicated region
    $region9: #{upsample_deconv.1} parent=5 // pred_check
      _
    $region10: #{upsample_deconv.1} parent=5 // pred_check_branch
      %231 = sbr.rel (%p228) target = $region12
    $region11: #{upsample_deconv.1} parent=5 // pred_region
      %s232 = ssub.s32 %s13, 1
      // Predicated region
      $region13: #{upsample_deconv.1} parent=11 // pred_check
        %p233 = pneg %p106
      $region14: #{upsample_deconv.1} parent=11 // pred_check_branch
        %235 = sbr.rel (%p233) target = $region16
      $region15: #{upsample_deconv.1} parent=11 // pred_region
        _
      $region16: #{upsample_deconv.1} parent=11 // pred_fallthru
        _
      // Predicated region
      $region17: #{upsample_deconv.1} parent=11 // pred_check
        %p236 = pneg %p127
      $region18: #{upsample_deconv.1} parent=11 // pred_check_branch
        %238 = sbr.rel (%p236) target = $region20
      $region19: #{upsample_deconv.1} parent=11 // pred_region
        _
      $region20: #{upsample_deconv.1} parent=11 // pred_fallthru
        _
      // Predicated region
      $region21: #{upsample_deconv.1} parent=11 // pred_check
        %p239 = pneg %p148
      $region22: #{upsample_deconv.1} parent=11 // pred_check_branch
        %241 = sbr.rel (%p239) target = $region24
      $region23: #{upsample_deconv.1} parent=11 // pred_region
        _
      $region24: #{upsample_deconv.1} parent=11 // pred_fallthru
        _
      // Predicated region
      $region25: #{upsample_deconv.1} parent=11 // pred_check
        %p242 = pneg %p169
      $region26: #{upsample_deconv.1} parent=11 // pred_check_branch
        %244 = sbr.rel (%p242) target = $region28
      $region27: #{upsample_deconv.1} parent=11 // pred_region
        _
      $region28: #{upsample_deconv.1} parent=11 // pred_fallthru
        _
      // Predicated region
      $region29: #{upsample_deconv.1} parent=11 // pred_check
        %p245 = pneg %p190
      $region30: #{upsample_deconv.1} parent=11 // pred_check_branch
        %247 = sbr.rel (%p245) target = $region32
      $region31: #{upsample_deconv.1} parent=11 // pred_region
        _
      $region32: #{upsample_deconv.1} parent=11 // pred_fallthru
        _
    $region12: #{upsample_deconv.1} parent=5 // pred_fallthru
      _
    %p248 = scmp.lt.s32.totalorder %s13, 8
    // Predicated region
    $region33: #{upsample_deconv.1} parent=5 // pred_check
      %p249 = pneg %p248
    $region34: #{upsample_deconv.1} parent=5 // pred_check_branch
      %251 = sbr.rel (%p249) target = $region36
    $region35: #{upsample_deconv.1} parent=5 // pred_region
      // Predicated region
      $region37: #{upsample_deconv.1} parent=35 // pred_check
        %p252 = pneg %p47
      $region38: #{upsample_deconv.1} parent=35 // pred_check_branch
        %254 = sbr.rel (%p252) target = $region40
      $region39: #{upsample_deconv.1} parent=35 // pred_region
        %s255 = smul.u32 4, %s21
        %s256 = ssub.s32 17, %s255
        %p257 = scmp.lt.s32.totalorder %s256, 4
        %s258 = scalar_select %p257, %s256, 4
        %s259 = smul.u32 128, %s258
        %s260 = smul.u32 %s259, 3
        %p261 = scmp.lt.s32.totalorder %s20, 1
        %s262 = scalar_select %p261, %s20, 1
        %p263 = scmp.lt.s32.totalorder %s255, 16
        %s264 = scalar_select %p263, %s255, 16
        %s265 = smul.addr %s264, 3
        %s266 = smul.addr %s262, 51
        %s267 = sadd.s32 %s265, %s266
        %s268 = smul.addr %s267, 8
        %s269 = scalar_lea.vmem %s0, %s268
        %s270 = smul.u32 4, %s21
        %s271 = ssub.s32 17, %s270
        %p272 = scmp.lt.s32.totalorder %s271, 4
        %s273 = scalar_select %p272, %s271, 4
        %s274 = smul.u32 128, %s273
        %s275 = smul.u32 %s274, 3
      $region40: #{upsample_deconv.1} parent=35 // pred_fallthru
        _
      // Predicated region
      $region41: #{upsample_deconv.1} parent=35 // pred_check
        %p276 = pneg %p79
      $region42: #{upsample_deconv.1} parent=35 // pred_check_branch
        %278 = sbr.rel (%p276) target = $region44
      $region43: #{upsample_deconv.1} parent=35 // pred_region
        %s279 = sadd.s32 %s21, 1
        %s280 = smul.u32 %s279, 4
        %p281 = scmp.lt.s32.totalorder %s20, 1
        %s282 = scalar_select %p281, %s20, 1
        %p283 = scmp.lt.s32.totalorder %s280, 16
        %s284 = scalar_select %p283, %s280, 16
        %s285 = smul.addr %s284, 3
        %s286 = smul.addr %s282, 51
        %s287 = sadd.s32 %s285, %s286
        %s288 = smul.addr %s287, 8
        %s289 = scalar_lea.vmem %s1, %s288
        %s290 = sadd.s32 %s21, 1
        %s291 = smul.u32 %s290, 4
      $region44: #{upsample_deconv.1} parent=35 // pred_fallthru
        _
    $region36: #{upsample_deconv.1} parent=5 // pred_fallthru
      _
    %p292 = scmp.le.s32.totalorder 1, %s13
    %p293 = scmp.lt.s32.totalorder %s13, 9
    %p294 = pnand %p292, %p293
    %p295 = pneg %p294
    // Predicated region
    $region45: #{upsample_deconv.1} parent=5 // pred_check
      _
    $region46: #{upsample_deconv.1} parent=5 // pred_check_branch
      %297 = sbr.rel (%p294) target = $region48
    $region47: #{upsample_deconv.1} parent=5 // pred_region
      %s298 = ssub.s32 %s13, 1
      %s299 = smul.u32 4, %s23
      %s300 = ssub.s32 17, %s299
      %p301 = scmp.lt.s32.totalorder %s300, 4
      %s302 = scalar_select %p301, %s300, 4
      %s303 = smul.u32 128, %s302
      %s304 = smul.u32 %s303, 3
      %p305 = scmp.lt.s32.totalorder %s22, 1
      %s306 = scalar_select %p305, %s22, 1
      %p307 = scmp.lt.s32.totalorder %s299, 16
      %s308 = scalar_select %p307, %s299, 16
      %s309 = smul.addr %s308, 3
      %s310 = smul.addr %s306, 51
      %s311 = sadd.s32 %s309, %s310
      %s312 = smul.addr %s311, 8
      %s313 = scalar_lea.vmem %s0, %s312
      %p314 = pneg %p53
      %p315 = pneg %p50
      %s316 = sadd.s32 %s23, 1
      %s317 = smul.u32 %s316, 4
      %p318 = scmp.lt.s32.totalorder %s22, 1
      %s319 = scalar_select %p318, %s22, 1
      %p320 = scmp.lt.s32.totalorder %s317, 16
      %s321 = scalar_select %p320, %s317, 16
      %s322 = smul.addr %s321, 3
      %s323 = smul.addr %s319, 51
      %s324 = sadd.s32 %s322, %s323
      %s325 = smul.addr %s324, 8
      %s326 = scalar_lea.vmem %s1, %s325
      %p327 = pneg %p85
      %p328 = pneg %p82
      %p329 = pneg %p106
      %p330 = pneg %p103
      %p331 = pneg %p127
      %p332 = pneg %p124
      %p333 = pneg %p148
      %p334 = pneg %p145
      %p335 = pneg %p169
      %p336 = pneg %p166
      %p337 = pneg %p190
      %p338 = pneg %p187
      %p339 = pneg %p218
      %p340 = pneg %p215
      %s341 = smul.u32 4, %s23
      %p342 = scmp.lt.s32.totalorder %s22, 1
      %s343 = scalar_select %p342, %s22, 1
      %p344 = scmp.lt.s32.totalorder %s341, 15
      %s345 = scalar_select %p344, %s341, 15
      %s346 = smul.addr %s345, 4
      %s347 = smul.addr %s343, 64
      %s348 = sadd.s32 %s346, %s347
      %s349 = smul.addr %s348, 8
      %s350 = scalar_lea.vmem %s7, %s349
      %s351 = smul.u32 4, %s23
      %s352 = ssub.s32 17, %s351
      %p353 = scmp.lt.s32.totalorder %s352, 4
      %s354 = scalar_select %p353, %s352, 4
      %s355 = smul.u32 128, %s354
      %s356 = smul.u32 %s355, 3
      %p357 = scmp.lt.s32.totalorder %s22, 1
      %s358 = scalar_select %p357, %s22, 1
      %p359 = scmp.lt.s32.totalorder %s351, 16
      %s360 = scalar_select %p359, %s351, 16
      %s361 = smul.addr %s360, 3
      %s362 = smul.addr %s358, 51
      %s363 = sadd.s32 %s361, %s362
      %s364 = smul.addr %s363, 8
      %s365 = scalar_lea.vmem %s0, %s364
      %s366 = smul.u32 4, %s23
      %s367 = ssub.s32 17, %s366
      %p368 = scmp.lt.s32.totalorder %s367, 4
      %s369 = scalar_select %p368, %s367, 4
      %s370 = smul.u32 128, %s369
      %s371 = smul.u32 %s370, 3
      %s372 = sadd.s32 %s23, 1
      %s373 = smul.u32 %s372, 4
      %p374 = scmp.lt.s32.totalorder %s22, 1
      %s375 = scalar_select %p374, %s22, 1
      %p376 = scmp.lt.s32.totalorder %s373, 16
      %s377 = scalar_select %p376, %s373, 16
      %s378 = smul.addr %s377, 3
      %s379 = smul.addr %s375, 51
      %s380 = sadd.s32 %s378, %s379
      %s381 = smul.addr %s380, 8
      %s382 = scalar_lea.vmem %s1, %s381
      %s383 = sadd.s32 %s23, 1
      %s384 = smul.u32 %s383, 4
      %s385 = smul.u32 4, %s23
      %p386 = scmp.lt.s32.totalorder %s22, 1
      %s387 = scalar_select %p386, %s22, 1
      %p388 = scmp.lt.s32.totalorder %s385, 15
      %s389 = scalar_select %p388, %s385, 15
      %s390 = smul.addr %s389, 4
      %s391 = smul.addr %s387, 64
      %s392 = sadd.s32 %s390, %s391
      %s393 = smul.addr %s392, 8
      %s394 = scalar_lea.vmem %s7, %s393
      %s395 = smul.u32 4, %s23
      %v396 = vld [vmem:[%s365] sm:$0xff]
      %v397 = vld [vmem:[%s365 + $0x8] sm:$0xff]
      %v398 = vld [vmem:[%s365 + $0x10] sm:$0x1]
      %v399 = vld [vmem:[%s365 + $0x18] sm:$0xff]
      %v400 = vld [vmem:[%s365 + $0x20] sm:$0xff]
      %v401 = vld [vmem:[%s365 + $0x28] sm:$0x1]
      %v402 = vld [vmem:[%s365 + $0x30] sm:$0xff]
      %v403 = vld [vmem:[%s365 + $0x38] sm:$0xff]
      %v404 = vld [vmem:[%s365 + $0x40] sm:$0x1]
      %v405 = vld [vmem:[%s365 + $0x48] sm:$0xff]
      %v406 = vld [vmem:[%s365 + $0x50] sm:$0xff]
      %v407 = vld [vmem:[%s365 + $0x58] sm:$0x1]
      %v408 = vld [vmem:[%s382] sm:$0xff]
      %v409 = vld [vmem:[%s382 + $0x8] sm:$0xff]
      %v410 = vld [vmem:[%s382 + $0x10] sm:$0x1]
      %vm423 = vcmask 1046528
      %v424 = vrot.slane %v396, 1
      %v425 = vrot.slane %v397, 1
      %v426 = vsel %vm423, %v424, %v425
      %v427 = vrot.slane %v398, 1
      %v428 = vsel %vm423, %v425, %v427
      %v429 = vrot.slane %v399, 1
      %v430 = vrot.slane %v400, 1
      %v431 = vsel %vm423, %v429, %v430
      %v432 = vrot.slane %v401, 1
      %v433 = vsel %vm423, %v430, %v432
      %v434 = vrot.slane %v402, 1
      %v435 = vrot.slane %v403, 1
      %v436 = vsel %vm423, %v434, %v435
      %v437 = vrot.slane %v404, 1
      %v438 = vsel %vm423, %v435, %v437
      %v439 = vrot.slane %v405, 1
      %v440 = vrot.slane %v406, 1
      %v441 = vsel %vm423, %v439, %v440
      %v442 = vrot.slane %v407, 1
      %v443 = vsel %vm423, %v440, %v442
      %v447 = vrot.slane %v408, 1
      %v448 = vrot.slane %v409, 1
      %v449 = vsel %vm423, %v447, %v448
      %v450 = vrot.slane %v410, 1
      %v451 = vsel %vm423, %v448, %v450
      %v452 = vld [vmem:[%s2] sm:$0xf]
      %vm453 = vcmask 31744
      %v454 = vsel %vm453, %v396, 0
      %v456 = vsel %vm453, %v397, 0
      %v458 = vsel %vm453, %v399, 0
      %v460 = vsel %vm453, %v400, 0
      %v462 = vsel %vm453, %v402, 0
      %v464 = vsel %vm453, %v403, 0
      %v466 = vsel %vm453, %v405, 0
      %v468 = vsel %vm453, %v406, 0
      %vm470 = vcmask 1043456
      %v472 = vsel %vm470, %v452, 0
      %474 = vmatprep.subr.mxu0 0.0
      %475 = vmatpush1.msra.mxu0 %v472
      %476 = vmatprep.subr.mxu0 0.0
      %477 = vmatpush1.msra.mxu0 0.0
      %478 = vmatprep.subr.mxu0 0.0
      %479 = vmatpush1.msra.mxu0 0.0
      %480 = vmatprep.subr.mxu0 0.0
      %481 = vmatpush1.msra.mxu0 0.0
      %482 = vmatprep.subr.mxu0 0.0
      %483 = vmatpush1.msra.mxu0 0.0
      %484 = vmatprep.subr.mxu0 0.0
      %485 = vmatpush1.msra.mxu0 0.0
      %486 = vmatprep.subr.mxu0 0.0
      %487 = vmatpush1.msra.mxu0 0.0
      %488 = vmatprep.subr.mxu0 0.0
      %489 = vmatpush1.msra.mxu0 0.0
      %490 = vmatprep.subr.mxu0 0.0
      %491 = vmatpush1.msra.mxu0 0.0
      %492 = vmatprep.subr.mxu0 0.0
      %493 = vmatpush1.msra.mxu0 0.0
      %494 = vmatprep.subr.mxu0 0.0
      %495 = vmatpush1.msra.mxu0 0.0
      %496 = vmatprep.subr.mxu0 0.0
      %497 = vmatpush1.msra.mxu0 0.0
      %498 = vmatprep.subr.mxu0 0.0
      %499 = vmatpush1.msra.mxu0 0.0
      %500 = vmatprep.subr.mxu0 0.0
      %501 = vmatpush1.msra.mxu0 0.0
      %502 = vmatprep.subr.mxu0 0.0
      %503 = vmatpush1.msra.mxu0 0.0
      %504 = vmatprep.subr.mxu0 0.0
      %505 = vmatpush1.msra.mxu0 0.0
      %506 = vmatprep.subr.mxu0 0.0
      %507 = vmatpush1.msra.mxu0 0.0
      %508 = vmatprep.subr.mxu0 0.0
      %509 = vmatpush1.msra.mxu0 0.0
      %510 = vmatprep.subr.mxu0 0.0
      %511 = vmatpush1.msra.mxu0 0.0
      %512 = vmatprep.subr.mxu0 0.0
      %513 = vmatpush1.msra.mxu0 0.0
      %514 = vmatprep.subr.mxu0 0.0
      %515 = vmatpush1.msra.mxu0 0.0
      %516 = vmatprep.subr.mxu0 0.0
      %517 = vmatpush1.msra.mxu0 0.0
      %518 = vmatprep.subr.mxu0 0.0
      %519 = vmatpush1.msra.mxu0 0.0
      %520 = vmatprep.subr.mxu0 0.0
      %521 = vmatpush1.msra.mxu0 0.0
      %522 = vmatprep.subr.mxu0 0.0
      %523 = vmatpush1.msra.mxu0 0.0
      %524 = vmatprep.subr.mxu0 0.0
      %525 = vmatpush1.msra.mxu0 0.0
      %526 = vmatprep.subr.mxu0 0.0
      %527 = vmatpush1.msra.mxu0 0.0
      %528 = vmatprep.subr.mxu0 0.0
      %529 = vmatpush1.msra.mxu0 0.0
      %530 = vmatprep.subr.mxu0 0.0
      %531 = vmatpush1.msra.mxu0 0.0
      %532 = vmatprep.subr.mxu0 0.0
      %533 = vmatpush1.msra.mxu0 0.0
      %534 = vmatprep.subr.mxu0 0.0
      %535 = vmatpush1.msra.mxu0 0.0
      %536 = vmatprep.subr.mxu0 0.0
      %537 = vmatpush1.msra.mxu0 0.0
      %538 = vmatprep.mubr.f32.mxu0 0.0
      %539 = vmatmul.mubr.f32.gmra.mrb[0].mxu0 %v454
      %v540 = vpop.f32.mrb[0].mxu0
      %v541 = vadd.f32 0.0, %v540
      %v542 = vpop.f32.mrb[0].mxu0
      %543 = vmatprep.mubr.f32.mxu0 0.0
      %544 = vmatmul.mubr.f32.gmra.mrb[0].mxu0 %v456
      %v545 = vpop.f32.mrb[0].mxu0
      %v546 = vadd.f32 0.0, %v545
      %v547 = vpop.f32.mrb[0].mxu0
      %548 = vmatprep.mubr.f32.mxu0 0.0
      %549 = vmatmul.mubr.f32.gmra.mrb[0].mxu0 %v458
      %v550 = vpop.f32.mrb[0].mxu0
      %v551 = vadd.f32 0.0, %v550
      %v552 = vpop.f32.mrb[0].mxu0
      %553 = vmatprep.mubr.f32.mxu0 0.0
      %554 = vmatmul.mubr.f32.gmra.mrb[0].mxu0 %v460
      %v555 = vpop.f32.mrb[0].mxu0
      %v556 = vadd.f32 0.0, %v555
      %v557 = vpop.f32.mrb[0].mxu0
      %558 = vmatprep.mubr.f32.mxu0 0.0
      %559 = vmatmul.mubr.f32.gmra.mrb[0].mxu0 %v462
      %v560 = vpop.f32.mrb[0].mxu0
      %v561 = vadd.f32 0.0, %v560
      %v562 = vpop.f32.mrb[0].mxu0
      %563 = vmatprep.mubr.f32.mxu0 0.0
      %564 = vmatmul.mubr.f32.gmra.mrb[0].mxu0 %v464
      %v565 = vpop.f32.mrb[0].mxu0
      %v566 = vadd.f32 0.0, %v565
      %v567 = vpop.f32.mrb[0].mxu0
      %568 = vmatprep.mubr.f32.mxu0 0.0
      %569 = vmatmul.mubr.f32.gmra.mrb[0].mxu0 %v466
      %v570 = vpop.f32.mrb[0].mxu0
      %v571 = vadd.f32 0.0, %v570
      %v572 = vpop.f32.mrb[0].mxu0
      %573 = vmatprep.mubr.f32.mxu0 0.0
      %574 = vmatmul.mubr.f32.gmra.mrb[0].mxu0 %v468
      %v575 = vpop.f32.mrb[0].mxu0
      %v576 = vadd.f32 0.0, %v575
      %v577 = vpop.f32.mrb[0].mxu0
      %578 = vdwg.mxu0
      %579 = vrot.lane.b32.xlu0 %v426, 4
      %v580 = vpop.permute.xlu0 %579
      %581 = vrot.lane.b32.xlu0 %v428, 4
      %v582 = vpop.permute.xlu0 %581
      %583 = vrot.lane.b32.xlu0 %v431, 4
      %v584 = vpop.permute.xlu0 %583
      %585 = vrot.lane.b32.xlu0 %v433, 4
      %v586 = vpop.permute.xlu0 %585
      %587 = vrot.lane.b32.xlu0 %v436, 4
      %v588 = vpop.permute.xlu0 %587
      %589 = vrot.lane.b32.xlu0 %v438, 4
      %v590 = vpop.permute.xlu0 %589
      %591 = vrot.lane.b32.xlu0 %v441, 4
      %v592 = vpop.permute.xlu0 %591
      %593 = vrot.lane.b32.xlu0 %v443, 4
      %v594 = vpop.permute.xlu0 %593
      %v603 = vsel %vm453, %v396, %v580
      %v604 = vsel %vm453, %v397, %v582
      %v605 = vsel %vm453, %v399, %v584
      %v606 = vsel %vm453, %v400, %v586
      %v607 = vsel %vm453, %v402, %v588
      %v608 = vsel %vm453, %v403, %v590
      %v609 = vsel %vm453, %v405, %v592
      %v610 = vsel %vm453, %v406, %v594
      %v611 = vld [vmem:[%s3] sm:$0xff]
      %vm612 = vcmask 64512
      %v614 = vsel %vm612, %v603, 0
      %v617 = vsel %vm612, %v604, 0
      %v620 = vsel %vm612, %v605, 0
      %v623 = vsel %vm612, %v606, 0
      %v626 = vsel %vm612, %v607, 0
      %v629 = vsel %vm612, %v608, 0
      %v632 = vsel %vm612, %v609, 0
      %v635 = vsel %vm612, %v610, 0
      %637 = vmatprep.subr.mxu0 0.0
      %638 = vmatpush1.msra.mxu0 %v611
      %639 = vmatprep.subr.mxu0 0.0
      %640 = vmatpush1.msra.mxu0 0.0
      %641 = vmatprep.subr.mxu0 0.0
      %642 = vmatpush1.msra.mxu0 0.0
      %643 = vmatprep.subr.mxu0 0.0
      %644 = vmatpush1.msra.mxu0 0.0
      %645 = vmatprep.subr.mxu0 0.0
      %646 = vmatpush1.msra.mxu0 0.0
      %647 = vmatprep.subr.mxu0 0.0
      %648 = vmatpush1.msra.mxu0 0.0
      %649 = vmatprep.subr.mxu0 0.0
      %650 = vmatpush1.msra.mxu0 0.0
      %651 = vmatprep.subr.mxu0 0.0
      %652 = vmatpush1.msra.mxu0 0.0
      %653 = vmatprep.subr.mxu0 0.0
      %654 = vmatpush1.msra.mxu0 0.0
      %655 = vmatprep.subr.mxu0 0.0
      %656 = vmatpush1.msra.mxu0 0.0
      %657 = vmatprep.subr.mxu0 0.0
      %658 = vmatpush1.msra.mxu0 0.0
      %659 = vmatprep.subr.mxu0 0.0
      %660 = vmatpush1.msra.mxu0 0.0
      %661 = vmatprep.subr.mxu0 0.0
      %662 = vmatpush1.msra.mxu0 0.0
      %663 = vmatprep.subr.mxu0 0.0
      %664 = vmatpush1.msra.mxu0 0.0
      %665 = vmatprep.subr.mxu0 0.0
      %666 = vmatpush1.msra.mxu0 0.0
      %667 = vmatprep.subr.mxu0 0.0
      %668 = vmatpush1.msra.mxu0 0.0
      %669 = vmatprep.subr.mxu0 0.0
      %670 = vmatpush1.msra.mxu0 0.0
      %671 = vmatprep.subr.mxu0 0.0
      %672 = vmatpush1.msra.mxu0 0.0
      %673 = vmatprep.subr.mxu0 0.0
      %674 = vmatpush1.msra.mxu0 0.0
      %675 = vmatprep.subr.mxu0 0.0
      %676 = vmatpush1.msra.mxu0 0.0
      %677 = vmatprep.subr.mxu0 0.0
      %678 = vmatpush1.msra.mxu0 0.0
      %679 = vmatprep.subr.mxu0 0.0
      %680 = vmatpush1.msra.mxu0 0.0
      %681 = vmatprep.subr.mxu0 0.0
      %682 = vmatpush1.msra.mxu0 0.0
      %683 = vmatprep.subr.mxu0 0.0
      %684 = vmatpush1.msra.mxu0 0.0
      %685 = vmatprep.subr.mxu0 0.0
      %686 = vmatpush1.msra.mxu0 0.0
      %687 = vmatprep.subr.mxu0 0.0
      %688 = vmatpush1.msra.mxu0 0.0
      %689 = vmatprep.subr.mxu0 0.0
      %690 = vmatpush1.msra.mxu0 0.0
      %691 = vmatprep.subr.mxu0 0.0
      %692 = vmatpush1.msra.mxu0 0.0
      %693 = vmatprep.subr.mxu0 0.0
      %694 = vmatpush1.msra.mxu0 0.0
      %695 = vmatprep.subr.mxu0 0.0
      %696 = vmatpush1.msra.mxu0 0.0
      %697 = vmatprep.subr.mxu0 0.0
      %698 = vmatpush1.msra.mxu0 0.0
      %699 = vmatprep.subr.mxu0 0.0
      %700 = vmatpush1.msra.mxu0 0.0
      %701 = vmatprep.mubr.f32.mxu0 0.0
      %702 = vmatmul.mubr.f32.gmra.mrb[0].mxu0 %v614
      %v703 = vpop.f32.mrb[0].mxu0
      %v704 = vadd.f32 0.0, %v703
      %v705 = vpop.f32.mrb[0].mxu0
      %706 = vmatprep.mubr.f32.mxu0 0.0
      %707 = vmatmul.mubr.f32.gmra.mrb[0].mxu0 %v617
      %v708 = vpop.f32.mrb[0].mxu0
      %v709 = vadd.f32 0.0, %v708
      %v710 = vpop.f32.mrb[0].mxu0
      %711 = vmatprep.mubr.f32.mxu0 0.0
      %712 = vmatmul.mubr.f32.gmra.mrb[0].mxu0 %v620
      %v713 = vpop.f32.mrb[0].mxu0
      %v714 = vadd.f32 0.0, %v713
      %v715 = vpop.f32.mrb[0].mxu0
      %716 = vmatprep.mubr.f32.mxu0 0.0
      %717 = vmatmul.mubr.f32.gmra.mrb[0].mxu0 %v623
      %v718 = vpop.f32.mrb[0].mxu0
      %v719 = vadd.f32 0.0, %v718
      %v720 = vpop.f32.mrb[0].mxu0
      %721 = vmatprep.mubr.f32.mxu0 0.0
      %722 = vmatmul.mubr.f32.gmra.mrb[0].mxu0 %v626
      %v723 = vpop.f32.mrb[0].mxu0
      %v724 = vadd.f32 0.0, %v723
      %v725 = vpop.f32.mrb[0].mxu0
      %726 = vmatprep.mubr.f32.mxu0 0.0
      %727 = vmatmul.mubr.f32.gmra.mrb[0].mxu0 %v629
      %v728 = vpop.f32.mrb[0].mxu0
      %v729 = vadd.f32 0.0, %v728
      %v730 = vpop.f32.mrb[0].mxu0
      %731 = vmatprep.mubr.f32.mxu0 0.0
      %732 = vmatmul.mubr.f32.gmra.mrb[0].mxu0 %v632
      %v733 = vpop.f32.mrb[0].mxu0
      %v734 = vadd.f32 0.0, %v733
      %v735 = vpop.f32.mrb[0].mxu0
      %736 = vmatprep.mubr.f32.mxu0 0.0
      %737 = vmatmul.mubr.f32.gmra.mrb[0].mxu0 %v635
      %v738 = vpop.f32.mrb[0].mxu0
      %v739 = vadd.f32 0.0, %v738
      %v740 = vpop.f32.mrb[0].mxu0
      %741 = vdwg.mxu0
      %742 = vrot.lane.b32.xlu0 %v399, 4
      %v743 = vpop.permute.xlu0 %742
      %744 = vrot.lane.b32.xlu0 %v400, 4
      %v745 = vpop.permute.xlu0 %744
      %746 = vrot.lane.b32.xlu0 %v402, 4
      %v747 = vpop.permute.xlu0 %746
      %748 = vrot.lane.b32.xlu0 %v403, 4
      %v749 = vpop.permute.xlu0 %748
      %750 = vrot.lane.b32.xlu0 %v405, 4
      %v751 = vpop.permute.xlu0 %750
      %752 = vrot.lane.b32.xlu0 %v406, 4
      %v753 = vpop.permute.xlu0 %752
      %754 = vrot.lane.b32.xlu0 %v408, 4
      %v755 = vpop.permute.xlu0 %754
      %756 = vrot.lane.b32.xlu0 %v409, 4
      %v757 = vpop.permute.xlu0 %756
      %v766 = vsel %vm453, %v396, %v743
      %v767 = vsel %vm453, %v397, %v745
      %v768 = vsel %vm453, %v399, %v747
      %v769 = vsel %vm453, %v400, %v749
      %v770 = vsel %vm453, %v402, %v751
      %v771 = vsel %vm453, %v403, %v753
      %v772 = vsel %vm453, %v405, %v755
      %v773 = vsel %vm453, %v406, %v757
      %v774 = vld [vmem:[%s4] sm:$0xff]
      %v776 = vsel %vm612, %v766, 0
      %v779 = vsel %vm612, %v767, 0
      %v782 = vsel %vm612, %v768, 0
      %v785 = vsel %vm612, %v769, 0
      %v788 = vsel %vm612, %v770, 0
      %v791 = vsel %vm612, %v771, 0
      %v794 = vsel %vm612, %v772, 0
      %v797 = vsel %vm612, %v773, 0
      %799 = vmatprep.subr.mxu0 0.0
      %800 = vmatpush1.msra.mxu0 %v774
      %801 = vmatprep.subr.mxu0 0.0
      %802 = vmatpush1.msra.mxu0 0.0
      %803 = vmatprep.subr.mxu0 0.0
      %804 = vmatpush1.msra.mxu0 0.0
      %805 = vmatprep.subr.mxu0 0.0
      %806 = vmatpush1.msra.mxu0 0.0
      %807 = vmatprep.subr.mxu0 0.0
      %808 = vmatpush1.msra.mxu0 0.0
      %809 = vmatprep.subr.mxu0 0.0
      %810 = vmatpush1.msra.mxu0 0.0
      %811 = vmatprep.subr.mxu0 0.0
      %812 = vmatpush1.msra.mxu0 0.0
      %813 = vmatprep.subr.mxu0 0.0
      %814 = vmatpush1.msra.mxu0 0.0
      %815 = vmatprep.subr.mxu0 0.0
      %816 = vmatpush1.msra.mxu0 0.0
      %817 = vmatprep.subr.mxu0 0.0
      %818 = vmatpush1.msra.mxu0 0.0
      %819 = vmatprep.subr.mxu0 0.0
      %820 = vmatpush1.msra.mxu0 0.0
      %821 = vmatprep.subr.mxu0 0.0
      %822 = vmatpush1.msra.mxu0 0.0
      %823 = vmatprep.subr.mxu0 0.0
      %824 = vmatpush1.msra.mxu0 0.0
      %825 = vmatprep.subr.mxu0 0.0
      %826 = vmatpush1.msra.mxu0 0.0
      %827 = vmatprep.subr.mxu0 0.0
      %828 = vmatpush1.msra.mxu0 0.0
      %829 = vmatprep.subr.mxu0 0.0
      %830 = vmatpush1.msra.mxu0 0.0
      %831 = vmatprep.subr.mxu0 0.0
      %832 = vmatpush1.msra.mxu0 0.0
      %833 = vmatprep.subr.mxu0 0.0
      %834 = vmatpush1.msra.mxu0 0.0
      %835 = vmatprep.subr.mxu0 0.0
      %836 = vmatpush1.msra.mxu0 0.0
      %837 = vmatprep.subr.mxu0 0.0
      %838 = vmatpush1.msra.mxu0 0.0
      %839 = vmatprep.subr.mxu0 0.0
      %840 = vmatpush1.msra.mxu0 0.0
      %841 = vmatprep.subr.mxu0 0.0
      %842 = vmatpush1.msra.mxu0 0.0
      %843 = vmatprep.subr.mxu0 0.0
      %844 = vmatpush1.msra.mxu0 0.0
      %845 = vmatprep.subr.mxu0 0.0
      %846 = vmatpush1.msra.mxu0 0.0
      %847 = vmatprep.subr.mxu0 0.0
      %848 = vmatpush1.msra.mxu0 0.0
      %849 = vmatprep.subr.mxu0 0.0
      %850 = vmatpush1.msra.mxu0 0.0
      %851 = vmatprep.subr.mxu0 0.0
      %852 = vmatpush1.msra.mxu0 0.0
      %853 = vmatprep.subr.mxu0 0.0
      %854 = vmatpush1.msra.mxu0 0.0
      %855 = vmatprep.subr.mxu0 0.0
      %856 = vmatpush1.msra.mxu0 0.0
      %857 = vmatprep.subr.mxu0 0.0
      %858 = vmatpush1.msra.mxu0 0.0
      %859 = vmatprep.subr.mxu0 0.0
      %860 = vmatpush1.msra.mxu0 0.0
      %861 = vmatprep.subr.mxu0 0.0
      %862 = vmatpush1.msra.mxu0 0.0
      %863 = vmatprep.mubr.f32.mxu0 0.0
      %864 = vmatmul.mubr.f32.gmra.mrb[0].mxu0 %v776
      %v865 = vpop.f32.mrb[0].mxu0
      %v866 = vadd.f32 0.0, %v865
      %v867 = vpop.f32.mrb[0].mxu0
      %868 = vmatprep.mubr.f32.mxu0 0.0
      %869 = vmatmul.mubr.f32.gmra.mrb[0].mxu0 %v779
      %v870 = vpop.f32.mrb[0].mxu0
      %v871 = vadd.f32 0.0, %v870
      %v872 = vpop.f32.mrb[0].mxu0
      %873 = vmatprep.mubr.f32.mxu0 0.0
      %874 = vmatmul.mubr.f32.gmra.mrb[0].mxu0 %v782
      %v875 = vpop.f32.mrb[0].mxu0
      %v876 = vadd.f32 0.0, %v875
      %v877 = vpop.f32.mrb[0].mxu0
      %878 = vmatprep.mubr.f32.mxu0 0.0
      %879 = vmatmul.mubr.f32.gmra.mrb[0].mxu0 %v785
      %v880 = vpop.f32.mrb[0].mxu0
      %v881 = vadd.f32 0.0, %v880
      %v882 = vpop.f32.mrb[0].mxu0
      %883 = vmatprep.mubr.f32.mxu0 0.0
      %884 = vmatmul.mubr.f32.gmra.mrb[0].mxu0 %v788
      %v885 = vpop.f32.mrb[0].mxu0
      %v886 = vadd.f32 0.0, %v885
      %v887 = vpop.f32.mrb[0].mxu0
      %888 = vmatprep.mubr.f32.mxu0 0.0
      %889 = vmatmul.mubr.f32.gmra.mrb[0].mxu0 %v791
      %v890 = vpop.f32.mrb[0].mxu0
      %v891 = vadd.f32 0.0, %v890
      %v892 = vpop.f32.mrb[0].mxu0
      %893 = vmatprep.mubr.f32.mxu0 0.0
      %894 = vmatmul.mubr.f32.gmra.mrb[0].mxu0 %v794
      %v895 = vpop.f32.mrb[0].mxu0
      %v896 = vadd.f32 0.0, %v895
      %v897 = vpop.f32.mrb[0].mxu0
      %898 = vmatprep.mubr.f32.mxu0 0.0
      %899 = vmatmul.mubr.f32.gmra.mrb[0].mxu0 %v797
      %v900 = vpop.f32.mrb[0].mxu0
      %v901 = vadd.f32 0.0, %v900
      %v902 = vpop.f32.mrb[0].mxu0
      %903 = vdwg.mxu0
      %904 = vrot.lane.b32.xlu0 %v399, 8
      %v905 = vpop.permute.xlu0 %904
      %906 = vrot.lane.b32.xlu0 %v400, 8
      %v907 = vpop.permute.xlu0 %906
      %908 = vrot.lane.b32.xlu0 %v402, 8
      %v909 = vpop.permute.xlu0 %908
      %910 = vrot.lane.b32.xlu0 %v403, 8
      %v911 = vpop.permute.xlu0 %910
      %912 = vrot.lane.b32.xlu0 %v405, 8
      %v913 = vpop.permute.xlu0 %912
      %914 = vrot.lane.b32.xlu0 %v406, 8
      %v915 = vpop.permute.xlu0 %914
      %916 = vrot.lane.b32.xlu0 %v408, 8
      %v917 = vpop.permute.xlu0 %916
      %918 = vrot.lane.b32.xlu0 %v409, 8
      %v919 = vpop.permute.xlu0 %918
      %928 = vrot.lane.b32.xlu0 %v431, 12
      %v929 = vpop.permute.xlu0 %928
      %930 = vrot.lane.b32.xlu0 %v433, 12
      %v931 = vpop.permute.xlu0 %930
      %932 = vrot.lane.b32.xlu0 %v436, 12
      %v933 = vpop.permute.xlu0 %932
      %934 = vrot.lane.b32.xlu0 %v438, 12
      %v935 = vpop.permute.xlu0 %934
      %936 = vrot.lane.b32.xlu0 %v441, 12
      %v937 = vpop.permute.xlu0 %936
      %938 = vrot.lane.b32.xlu0 %v443, 12
      %v939 = vpop.permute.xlu0 %938
      %940 = vrot.lane.b32.xlu0 %v449, 12
      %v941 = vpop.permute.xlu0 %940
      %942 = vrot.lane.b32.xlu0 %v451, 12
      %v943 = vpop.permute.xlu0 %942
      %v952 = vsel %vm612, %v603, %v905
      %v953 = vsel %vm612, %v604, %v907
      %v954 = vsel %vm612, %v605, %v909
      %v955 = vsel %vm612, %v606, %v911
      %v956 = vsel %vm612, %v607, %v913
      %v957 = vsel %vm612, %v608, %v915
      %v958 = vsel %vm612, %v609, %v917
      %v959 = vsel %vm612, %v610, %v919
      %vm960 = vcmask 97280
      %v961 = vsel %vm960, %v952, %v929
      %v962 = vsel %vm960, %v953, %v931
      %v963 = vsel %vm960, %v954, %v933
      %v964 = vsel %vm960, %v955, %v935
      %v965 = vsel %vm960, %v956, %v937
      %v966 = vsel %vm960, %v957, %v939
      %v967 = vsel %vm960, %v958, %v941
      %v968 = vsel %vm960, %v959, %v943
      %v969 = vld [vmem:[%s5] sm:$0xff]
      %v970 = vld [vmem:[%s5 + $0x8] sm:$0xff]
      %vm971 = vcmask 130048
      %v973 = vsel %vm971, %v961, 0
      %v976 = vsel %vm971, %v962, 0
      %v979 = vsel %vm971, %v963, 0
      %v982 = vsel %vm971, %v964, 0
      %v985 = vsel %vm971, %v965, 0
      %v988 = vsel %vm971, %v966, 0
      %v991 = vsel %vm971, %v967, 0
      %v994 = vsel %vm971, %v968, 0
      %996 = vmatprep.subr.mxu0 0.0
      %997 = vmatpush1.msra.mxu0 %v969
      %998 = vmatprep.subr.mxu0 0.0
      %999 = vmatpush1.msra.mxu0 %v970
      %1000 = vmatprep.subr.mxu0 0.0
      %1001 = vmatpush1.msra.mxu0 0.0
      %1002 = vmatprep.subr.mxu0 0.0
      %1003 = vmatpush1.msra.mxu0 0.0
      %1004 = vmatprep.subr.mxu0 0.0
      %1005 = vmatpush1.msra.mxu0 0.0
      %1006 = vmatprep.subr.mxu0 0.0
      %1007 = vmatpush1.msra.mxu0 0.0
      %1008 = vmatprep.subr.mxu0 0.0
      %1009 = vmatpush1.msra.mxu0 0.0
      %1010 = vmatprep.subr.mxu0 0.0
      %1011 = vmatpush1.msra.mxu0 0.0
      %1012 = vmatprep.subr.mxu0 0.0
      %1013 = vmatpush1.msra.mxu0 0.0
      %1014 = vmatprep.subr.mxu0 0.0
      %1015 = vmatpush1.msra.mxu0 0.0
      %1016 = vmatprep.subr.mxu0 0.0
      %1017 = vmatpush1.msra.mxu0 0.0
      %1018 = vmatprep.subr.mxu0 0.0
      %1019 = vmatpush1.msra.mxu0 0.0
      %1020 = vmatprep.subr.mxu0 0.0
      %1021 = vmatpush1.msra.mxu0 0.0
      %1022 = vmatprep.subr.mxu0 0.0
      %1023 = vmatpush1.msra.mxu0 0.0
      %1024 = vmatprep.subr.mxu0 0.0
      %1025 = vmatpush1.msra.mxu0 0.0
      %1026 = vmatprep.subr.mxu0 0.0
      %1027 = vmatpush1.msra.mxu0 0.0
      %1028 = vmatprep.subr.mxu0 0.0
      %1029 = vmatpush1.msra.mxu0 0.0
      %1030 = vmatprep.subr.mxu0 0.0
      %1031 = vmatpush1.msra.mxu0 0.0
      %1032 = vmatprep.subr.mxu0 0.0
      %1033 = vmatpush1.msra.mxu0 0.0
      %1034 = vmatprep.subr.mxu0 0.0
      %1035 = vmatpush1.msra.mxu0 0.0
      %1036 = vmatprep.subr.mxu0 0.0
      %1037 = vmatpush1.msra.mxu0 0.0
      %1038 = vmatprep.subr.mxu0 0.0
      %1039 = vmatpush1.msra.mxu0 0.0
      %1040 = vmatprep.subr.mxu0 0.0
      %1041 = vmatpush1.msra.mxu0 0.0
      %1042 = vmatprep.subr.mxu0 0.0
      %1043 = vmatpush1.msra.mxu0 0.0
      %1044 = vmatprep.subr.mxu0 0.0
      %1045 = vmatpush1.msra.mxu0 0.0
      %1046 = vmatprep.subr.mxu0 0.0
      %1047 = vmatpush1.msra.mxu0 0.0
      %1048 = vmatprep.subr.mxu0 0.0
      %1049 = vmatpush1.msra.mxu0 0.0
      %1050 = vmatprep.subr.mxu0 0.0
      %1051 = vmatpush1.msra.mxu0 0.0
      %1052 = vmatprep.subr.mxu0 0.0
      %1053 = vmatpush1.msra.mxu0 0.0
      %1054 = vmatprep.subr.mxu0 0.0
      %1055 = vmatpush1.msra.mxu0 0.0
      %1056 = vmatprep.subr.mxu0 0.0
      %1057 = vmatpush1.msra.mxu0 0.0
      %1058 = vmatprep.subr.mxu0 0.0
      %1059 = vmatpush1.msra.mxu0 0.0
      %1060 = vmatprep.mubr.f32.mxu0 0.0
      %1061 = vmatmul.mubr.f32.gmra.mrb[0].mxu0 %v973
      %v1062 = vpop.f32.mrb[0].mxu0
      %v1063 = vadd.f32 0.0, %v1062
      %v1064 = vpop.f32.mrb[0].mxu0
      %1065 = vmatprep.mubr.f32.mxu0 0.0
      %1066 = vmatmul.mubr.f32.gmra.mrb[0].mxu0 %v976
      %v1067 = vpop.f32.mrb[0].mxu0
      %v1068 = vadd.f32 0.0, %v1067
      %v1069 = vpop.f32.mrb[0].mxu0
      %1070 = vmatprep.mubr.f32.mxu0 0.0
      %1071 = vmatmul.mubr.f32.gmra.mrb[0].mxu0 %v979
      %v1072 = vpop.f32.mrb[0].mxu0
      %v1073 = vadd.f32 0.0, %v1072
      %v1074 = vpop.f32.mrb[0].mxu0
      %1075 = vmatprep.mubr.f32.mxu0 0.0
      %1076 = vmatmul.mubr.f32.gmra.mrb[0].mxu0 %v982
      %v1077 = vpop.f32.mrb[0].mxu0
      %v1078 = vadd.f32 0.0, %v1077
      %v1079 = vpop.f32.mrb[0].mxu0
      %1080 = vmatprep.mubr.f32.mxu0 0.0
      %1081 = vmatmul.mubr.f32.gmra.mrb[0].mxu0 %v985
      %v1082 = vpop.f32.mrb[0].mxu0
      %v1083 = vadd.f32 0.0, %v1082
      %v1084 = vpop.f32.mrb[0].mxu0
      %1085 = vmatprep.mubr.f32.mxu0 0.0
      %1086 = vmatmul.mubr.f32.gmra.mrb[0].mxu0 %v988
      %v1087 = vpop.f32.mrb[0].mxu0
      %v1088 = vadd.f32 0.0, %v1087
      %v1089 = vpop.f32.mrb[0].mxu0
      %1090 = vmatprep.mubr.f32.mxu0 0.0
      %1091 = vmatmul.mubr.f32.gmra.mrb[0].mxu0 %v991
      %v1092 = vpop.f32.mrb[0].mxu0
      %v1093 = vadd.f32 0.0, %v1092
      %v1094 = vpop.f32.mrb[0].mxu0
      %1095 = vmatprep.mubr.f32.mxu0 0.0
      %1096 = vmatmul.mubr.f32.gmra.mrb[0].mxu0 %v994
      %v1097 = vpop.f32.mrb[0].mxu0
      %v1098 = vadd.f32 0.0, %v1097
      %v1099 = vpop.f32.mrb[0].mxu0
      %1100 = vdwg.mxu0
      %v1101 = vld [vmem:[%s6] sm:$0x1]
      %1110 = vrot.lane.b32.xlu0 %v704, 4
      %v1111 = vpop.permute.xlu0 %1110
      %1112 = vrot.lane.b32.xlu0 %v709, 4
      %v1113 = vpop.permute.xlu0 %1112
      %1114 = vrot.lane.b32.xlu0 %v714, 4
      %v1115 = vpop.permute.xlu0 %1114
      %1116 = vrot.lane.b32.xlu0 %v719, 4
      %v1117 = vpop.permute.xlu0 %1116
      %1118 = vrot.lane.b32.xlu0 %v724, 4
      %v1119 = vpop.permute.xlu0 %1118
      %1120 = vrot.lane.b32.xlu0 %v729, 4
      %v1121 = vpop.permute.xlu0 %1120
      %1122 = vrot.lane.b32.xlu0 %v734, 4
      %v1123 = vpop.permute.xlu0 %1122
      %1124 = vrot.lane.b32.xlu0 %v739, 4
      %v1125 = vpop.permute.xlu0 %1124
      %v1134 = vsel %vm453, %v541, %v1111
      %v1135 = vsel %vm453, %v546, %v1113
      %v1136 = vsel %vm453, %v551, %v1115
      %v1137 = vsel %vm453, %v556, %v1117
      %v1138 = vsel %vm453, %v561, %v1119
      %v1139 = vsel %vm453, %v566, %v1121
      %v1140 = vsel %vm453, %v571, %v1123
      %v1141 = vsel %vm453, %v576, %v1125
      %v1143 = vlaneseq
      %v1144 = vshrl.u32 %v1143, 7
      %v1145 = vsub.s32 0, %v1144
      %v1146 = vrot.slane %v1101, %v1145
      %v1148 = vadd.f32 %v1134, %v1146
      %v1149 = vadd.f32 %v1135, %v1146
      %v1150 = vadd.f32 %v1136, %v1146
      %v1151 = vadd.f32 %v1137, %v1146
      %v1152 = vadd.f32 %v1138, %v1146
      %v1153 = vadd.f32 %v1139, %v1146
      %v1154 = vadd.f32 %v1140, %v1146
      %v1155 = vadd.f32 %v1141, %v1146
      %1164 = vrot.lane.b32.xlu0 %v1063, 4
      %v1165 = vpop.permute.xlu0 %1164
      %1166 = vrot.lane.b32.xlu0 %v1068, 4
      %v1167 = vpop.permute.xlu0 %1166
      %1168 = vrot.lane.b32.xlu0 %v1073, 4
      %v1169 = vpop.permute.xlu0 %1168
      %1170 = vrot.lane.b32.xlu0 %v1078, 4
      %v1171 = vpop.permute.xlu0 %1170
      %1172 = vrot.lane.b32.xlu0 %v1083, 4
      %v1173 = vpop.permute.xlu0 %1172
      %1174 = vrot.lane.b32.xlu0 %v1088, 4
      %v1175 = vpop.permute.xlu0 %1174
      %1176 = vrot.lane.b32.xlu0 %v1093, 4
      %v1177 = vpop.permute.xlu0 %1176
      %1178 = vrot.lane.b32.xlu0 %v1098, 4
      %v1179 = vpop.permute.xlu0 %1178
      %v1188 = vsel %vm453, %v866, %v1165
      %v1189 = vsel %vm453, %v871, %v1167
      %v1190 = vsel %vm453, %v876, %v1169
      %v1191 = vsel %vm453, %v881, %v1171
      %v1192 = vsel %vm453, %v886, %v1173
      %v1193 = vsel %vm453, %v891, %v1175
      %v1194 = vsel %vm453, %v896, %v1177
      %v1195 = vsel %vm453, %v901, %v1179
      %v1196 = vadd.f32 %v1188, %v1146
      %v1197 = vadd.f32 %v1189, %v1146
      %v1198 = vadd.f32 %v1190, %v1146
      %v1199 = vadd.f32 %v1191, %v1146
      %v1200 = vadd.f32 %v1192, %v1146
      %v1201 = vadd.f32 %v1193, %v1146
      %v1202 = vadd.f32 %v1194, %v1146
      %v1203 = vadd.f32 %v1195, %v1146
      %1204 = vst.msk [vmem:[%s394] sm:$0xff] %vm612, %v1148
      %1205 = vst.msk [vmem:[%s394 + $0x8] sm:$0xff] %vm612, %v1149
      %1206 = vst.msk [vmem:[%s394 + $0x20] sm:$0xff] %vm612, %v1150
      %1207 = vst.msk [vmem:[%s394 + $0x28] sm:$0xff] %vm612, %v1151
      %1208 = vst.msk [vmem:[%s394 + $0x40] sm:$0xff] %vm612, %v1152
      %1209 = vst.msk [vmem:[%s394 + $0x48] sm:$0xff] %vm612, %v1153
      %1210 = vst.msk [vmem:[%s394 + $0x60] sm:$0xff] %vm612, %v1154
      %1211 = vst.msk [vmem:[%s394 + $0x68] sm:$0xff] %vm612, %v1155
      %s1212 = scalar_lea.vmem %s394, 16
      %1213 = vst.msk [vmem:[%s1212] sm:$0xff] %vm612, %v1196
      %1214 = vst.msk [vmem:[%s1212 + $0x8] sm:$0xff] %vm612, %v1197
      %1215 = vst.msk [vmem:[%s1212 + $0x20] sm:$0xff] %vm612, %v1198
      %1216 = vst.msk [vmem:[%s1212 + $0x28] sm:$0xff] %vm612, %v1199
      %1217 = vst.msk [vmem:[%s1212 + $0x40] sm:$0xff] %vm612, %v1200
      %1218 = vst.msk [vmem:[%s1212 + $0x48] sm:$0xff] %vm612, %v1201
      %1219 = vst.msk [vmem:[%s1212 + $0x60] sm:$0xff] %vm612, %v1202
      %1220 = vst.msk [vmem:[%s1212 + $0x68] sm:$0xff] %vm612, %v1203
      %s1221 = smul.u32 4, %s23
      %p1222 = scmp.lt.s32.totalorder %s22, 1
      %s1223 = scalar_select %p1222, %s22, 1
      %p1224 = scmp.lt.s32.totalorder %s1221, 15
      %s1225 = scalar_select %p1224, %s1221, 15
      %s1226 = smul.addr %s1225, 4
      %s1227 = smul.addr %s1223, 64
      %s1228 = sadd.s32 %s1226, %s1227
      %s1229 = smul.addr %s1228, 8
      %s1230 = scalar_lea.vmem %s7, %s1229
      // Predicated region
      $region49: #{upsample_deconv.1} parent=47 // pred_check
        %p1231 = pneg %p215
      $region50: #{upsample_deconv.1} parent=47 // pred_check_branch
        %1233 = sbr.rel (%p1231) target = $region52
      $region51: #{upsample_deconv.1} parent=47 // pred_region
        %s1234 = smul.u32 4, %s23
      $region52: #{upsample_deconv.1} parent=47 // pred_fallthru
        _
    $region48: #{upsample_deconv.1} parent=5 // pred_fallthru
      _
    %p1235 = scmp.le.s32.totalorder 2, %s13
    // Predicated region
    $region53: #{upsample_deconv.1} parent=5 // pred_check
      %p1236 = pneg %p1235
    $region54: #{upsample_deconv.1} parent=5 // pred_check_branch
      %1238 = sbr.rel (%p1236) target = $region56
    $region55: #{upsample_deconv.1} parent=5 // pred_region
      %s1239 = ssub.s32 %s13, 2
      // Predicated region
      $region57: #{upsample_deconv.1} parent=55 // pred_check
        %p1240 = pneg %p221
      $region58: #{upsample_deconv.1} parent=55 // pred_check_branch
        %1242 = sbr.rel (%p1240) target = $region60
      $region59: #{upsample_deconv.1} parent=55 // pred_region
        %s1243 = smul.u32 4, %s25
        %p1244 = scmp.lt.s32.totalorder %s24, 1
        %s1245 = scalar_select %p1244, %s24, 1
        %p1246 = scmp.lt.s32.totalorder %s1243, 15
        %s1247 = scalar_select %p1246, %s1243, 15
        %s1248 = smul.addr %s1247, 4
        %s1249 = smul.addr %s1245, 64
        %s1250 = sadd.s32 %s1248, %s1249
        %s1251 = smul.addr %s1250, 8
        %s1252 = scalar_lea.vmem %s7, %s1251
      $region60: #{upsample_deconv.1} parent=55 // pred_fallthru
        _
    $region56: #{upsample_deconv.1} parent=5 // pred_fallthru
      _
  $region6: #{upsample_deconv.1} parent=0 // loop_footer
    %s17 = sadd.s32 1, %s13
  $region7: #{upsample_deconv.1} parent=0 // loop_footer_branch
    %12 = sbr.rel target = $region3
  $region8: #{upsample_deconv.1} parent=0 // loop_exit
    _

</llo_original>
